<compile_context>
chip_gen: v5e
topology: v5e:2x2
jax: 0.10.0
libtpu: 0.0.40
codegen_flags: <defaults>
</compile_context>

<pallas_src>
import functools

import jax
import jax.numpy as jnp
from jax.experimental import pallas as pl
from jax.experimental.pallas import tpu as pltpu


def _round_up(a, b):
    return (a + b - 1) // b * b


def _conv_decomp_kernel(x_ref, wcore_ref, wlast_ref, bias_ref, o_ref, patches_ref, *,
                        Nb, Cin_pad, KH, KW, Wp, dh, dw, M, M_pad, Ho, sh):
    """One grid step: Nb images, fused (first∘core) conv + ReLU + last 1x1 + bias.

    Layout (channels on sublanes, flattened spatial on lanes):
      x_ref       (Nb, Cin_pad, Lx)         compute dtype  zero-padded images
      wcore_ref   (L, KH*KW*Cin_pad)        compute dtype  merged first∘core weight
      wlast_ref   (Cout, L)                 compute dtype
      bias_ref    (Cout, 1)                 float32
      o_ref       (Nb, Cout, Ho*Wp)         out dtype      row-subsampled output
      patches_ref (KH*KW*Cin_pad, Nb*M_pad) compute dtype  block-wide im2col scratch
    """
    # --- im2col for the whole block: tap (kh,kw) of image i is the flattened
    #     image shifted by a static lane offset.  Image i owns lane columns
    #     [i*M_pad, i*M_pad+M) (128-aligned starts); tap t owns sublane rows
    #     [t*Cin_pad, (t+1)*Cin_pad) (whole packed vregs after Cin padding). ---
    for i in range(Nb):
        x_img = x_ref[i]                                      # (Cin_pad, Lx)
        col = i * M_pad
        for kh in range(KH):
            for kw in range(KW):
                t = kh * KW + kw
                off = kh * dh * Wp + kw * dw                  # static offset
                patches_ref[t * Cin_pad:(t + 1) * Cin_pad, col:col + M] = (
                    x_img[:, off:off + M])

    patches = patches_ref[...]                                # (K_pad, Nb*M_pad)
    # core(first(x)) for the whole block: a single wide MXU dot.
    h = jnp.dot(wcore_ref[...], patches,
                preferred_element_type=jnp.float32)           # (L, Nb*M_pad)
    h = jnp.maximum(h, 0.0)                                   # ReLU in f32
    # last 1x1 conv; bias broadcast once per block (hoisted out of any loop).
    out = jnp.dot(wlast_ref[...], h.astype(wlast_ref.dtype),
                  preferred_element_type=jnp.float32)         # (Cout, Nb*M_pad)
    out = (out + bias_ref[...]).astype(o_ref.dtype)

    if sh == 1:
        for i in range(Nb):
            o_ref[i] = out[:, i * M_pad:i * M_pad + M]
    else:
        # Row subsampling inside the kernel: store only every sh-th dense row
        # (contiguous Wp-lane slab) -> sh x less HBM write traffic.
        for i in range(Nb):
            for r in range(Ho):
                src = i * M_pad + r * sh * Wp
                o_ref[i, :, r * Wp:(r + 1) * Wp] = out[:, src:src + Wp]


def conv_decomp_ae_forward(x_nchw, first, core, last, bias,
                           stride=(1, 1), padding=(1, 1), dilation=(1, 1),
                           block_n=32, compute_dtype=jnp.bfloat16):
    """Fused ConvDecompAe forward.

    x_nchw : (N, Cin, H, W) float32
    first  : (Cin, R)
    core   : (L, R, KH, KW)
    last   : (Cout, L)
    bias   : (Cout,)
    returns: (N, Cout, Ho, Wo) in x_nchw.dtype
    """
    N, Cin, H, W = x_nchw.shape
    L, R, KH, KW = core.shape
    Cout = last.shape[0]
    sh, sw = stride
    ph, pw = padding
    dh, dw = dilation

    Hp, Wp = H + 2 * ph, W + 2 * pw
    H1 = Hp - dh * (KH - 1)          # dense (stride-1) output rows
    W1 = Wp - dw * (KW - 1)          # dense (stride-1) output cols
    assert H1 >= 1 and W1 >= 1, "kernel does not cover the padded input"
    Ho = (H1 - 1) // sh + 1
    Wo = (W1 - 1) // sw + 1
    # Guard: subsampled rows/cols must stay inside the valid dense region
    # (the dense rows are Wp wide and contain wrap-around junk past col W1).
    assert (Ho - 1) * sh < H1 and (Wo - 1) * sw < W1

    itemsize = jnp.dtype(compute_dtype).itemsize
    sub_gran = 8 * (4 // itemsize)   # sublane packing granularity: 8 f32 / 16 bf16
    Cin_pad = _round_up(Cin, sub_gran)
    K_pad = KH * KW * Cin_pad        # im2col contraction depth (padded)
    M = H1 * Wp                      # flattened dense-output length (lane axis)
    M_pad = _round_up(M, 128)        # 128-aligned per-image lane slot in scratch
    extra = dw * (KW - 1)            # flat tail pad so every tap slice has length M
    Lx = Hp * Wp + extra
    out_dtype = compute_dtype        # bf16 output halves HBM write traffic

    # ---- host-side weight prep (no activation traffic) ----
    # Fold the first 1x1 into the core conv (first has no bias, so folding
    # commutes with zero padding); pad the Cin axis with zero columns.
    wm = jnp.einsum('lrhw,cr->lhwc',
                    core.astype(jnp.float32), first.astype(jnp.float32),
                    precision=jax.lax.Precision.HIGHEST)      # (L, KH, KW, Cin)
    wm = jnp.pad(wm, ((0, 0), (0, 0), (0, 0), (0, Cin_pad - Cin)))
    wm = wm.reshape(L, K_pad).astype(compute_dtype)           # (L, KH*KW*Cin_pad)
    wl = last.astype(compute_dtype)                           # (Cout, L)
    b2 = bias.astype(jnp.float32).reshape(Cout, 1)            # (Cout, 1)

    # ---- activation prep: NCHW kept (channels on sublanes), channels zero-
    #      padded to Cin_pad, spatial zero-pad, flatten H*W onto lanes ----
    x_pad = jnp.pad(x_nchw, ((0, 0), (0, Cin_pad - Cin), (ph, ph), (pw, pw)))
    x_flat = x_pad.reshape(N, Cin_pad, Hp * Wp)
    if extra:
        x_flat = jnp.pad(x_flat, ((0, 0), (0, 0), (0, extra)))
    x_flat = x_flat.astype(compute_dtype)

    # Batch tiling: Nb images per grid step (amortizes ~0.35us/step overhead),
    # clamped so there are >= 2 steps when N > 1 (both TensorCores on v7x).
    Nb = max(1, min(block_n, pl.cdiv(N, 2))) if N > 1 else 1
    Np = pl.cdiv(N, Nb) * Nb
    if Np != N:
        x_flat = jnp.pad(x_flat, ((0, Np - N), (0, 0), (0, 0)))

    kernel = functools.partial(
        _conv_decomp_kernel,
        Nb=Nb, Cin_pad=Cin_pad, KH=KH, KW=KW, Wp=Wp, dh=dh, dw=dw,
        M=M, M_pad=M_pad, Ho=Ho, sh=sh)

    out_itemsize = jnp.dtype(out_dtype).itemsize
    x_blk = Nb * Cin_pad * Lx * itemsize
    o_blk = Nb * Cout * Ho * Wp * out_itemsize
    w_bytes = (L * K_pad + Cout * L) * itemsize + Cout * 4
    scratch_bytes = K_pad * Nb * M_pad * itemsize
    # Double-buffered in/out blocks + weights, single-buffered scratch, slack.
    vmem_need = 2 * (x_blk + o_blk + w_bytes) + scratch_bytes
    vmem_limit = int(min(max(vmem_need * 5 // 4 + (2 << 20), 16 << 20), 64 << 20))

    cost = pl.CostEstimate(
        flops=int(2 * Np * M_pad * (K_pad * L + L * Cout)),
        transcendentals=0,
        bytes_accessed=int(Np * Cin_pad * Lx * itemsize
                           + Np * Cout * Ho * Wp * out_itemsize
                           + (L * K_pad + Cout * L) * itemsize + Cout * 4))

    out_flat = pl.pallas_call(
        kernel,
        out_shape=jax.ShapeDtypeStruct((Np, Cout, Ho * Wp), out_dtype),
        grid_spec=pltpu.PrefetchScalarGridSpec(
            num_scalar_prefetch=0,
            grid=(Np // Nb,),
            in_specs=[
                pl.BlockSpec((Nb, Cin_pad, Lx), lambda n: (n, 0, 0)),
                pl.BlockSpec((L, K_pad), lambda n: (0, 0)),
                pl.BlockSpec((Cout, L), lambda n: (0, 0)),
                pl.BlockSpec((Cout, 1), lambda n: (0, 0)),
            ],
            out_specs=pl.BlockSpec((Nb, Cout, Ho * Wp), lambda n: (n, 0, 0)),
            scratch_shapes=[pltpu.VMEM((K_pad, Nb * M_pad), compute_dtype)],
        ),
        compiler_params=pltpu.CompilerParams(
            dimension_semantics=("parallel",),
            vmem_limit_bytes=vmem_limit),
        cost_estimate=cost,
    )(x_flat, wm, wl, b2)

    # Glue: free reshape + column subsample (rows already subsampled in-kernel)
    # + cast back to the input dtype.
    out = out_flat[:N].reshape(N, Cout, Ho, Wp)
    out = out[:, :, :, ::sw][:, :, :, :Wo]
    return out.astype(x_nchw.dtype)


def _reference(x_nchw, first, core, last, bias, stride, padding, dilation):
    """Pure-JAX reference mirroring the PyTorch module (NCHW convs)."""
    dn = jax.lax.conv_dimension_numbers(x_nchw.shape,
                                        (1, 1, 1, 1), ("NCHW", "OIHW", "NCHW"))
    w_first = jnp.transpose(first, (1, 0))[:, :, None, None]
    h = jax.lax.conv_general_dilated(x_nchw, w_first, (1, 1), "VALID",
                                     rhs_dilation=dilation, dimension_numbers=dn)
    h = jax.lax.conv_general_dilated(
        h, core, stride,
        [(padding[0], padding[0]), (padding[1], padding[1])],
        rhs_dilation=dilation, dimension_numbers=dn)
    h = jnp.maximum(h, 0.0)
    w_last = last[:, :, None, None]
    h = jax.lax.conv_general_dilated(h, w_last, (1, 1), "VALID",
                                     rhs_dilation=dilation, dimension_numbers=dn)
    return h + bias[None, :, None, None]


if __name__ == "__main__":
    # Shapes consistent with the module:
    #   original layer Conv2d(Cin=4 -> Cout=6, 3x3), Tucker ranks R=8, L=8.
    N, Cin, H, W = 2, 4, 16, 16
    R, L, Cout = 8, 8, 6
    KH, KW = 3, 3

    key = jax.random.PRNGKey(0)
    k_x, k_f, k_c, k_l, k_b, k_x2 = jax.random.split(key, 6)
    x = jax.random.normal(k_x, (N, Cin, H, W), jnp.float32)
    first = jax.random.normal(k_f, (Cin, R), jnp.float32) * 0.3
    core = jax.random.normal(k_c, (L, R, KH, KW), jnp.float32) * 0.3
    last = jax.random.normal(k_l, (Cout, L), jnp.float32) * 0.3
    bias = jax.random.normal(k_b, (Cout,), jnp.float32) * 0.1

    # --- config A: stride 1, pad 1, dilation 1 (same-size 3x3 conv) ---
    cfg_a = dict(stride=(1, 1), padding=(1, 1), dilation=(1, 1))
    ref_a = _reference(x, first, core, last, bias, **cfg_a)

    fwd_a_f32 = jax.jit(functools.partial(conv_decomp_ae_forward,
                                          compute_dtype=jnp.float32, **cfg_a))
    out_a_f32 = jax.block_until_ready(fwd_a_f32(x, first, core, last, bias))
    assert out_a_f32.shape == ref_a.shape, (out_a_f32.shape, ref_a.shape)
    assert jnp.allclose(out_a_f32, ref_a, atol=1e-4, rtol=1e-4), \
        float(jnp.max(jnp.abs(out_a_f32 - ref_a)))

    fwd_a_bf16 = jax.jit(functools.partial(conv_decomp_ae_forward,
                                           compute_dtype=jnp.bfloat16, **cfg_a))
    out_a_bf16 = jax.block_until_ready(fwd_a_bf16(x, first, core, last, bias))
    assert out_a_bf16.shape == ref_a.shape
    assert jnp.allclose(out_a_bf16, ref_a, atol=6e-2, rtol=6e-2), \
        float(jnp.max(jnp.abs(out_a_bf16 - ref_a)))

    # --- config B: stride 2, pad 2, dilation 2 (row-subsampled output path) ---
    cfg_b = dict(stride=(2, 2), padding=(2, 2), dilation=(2, 2))
    ref_b = _reference(x, first, core, last, bias, **cfg_b)
    fwd_b_f32 = jax.jit(functools.partial(conv_decomp_ae_forward,
                                          compute_dtype=jnp.float32, **cfg_b))
    out_b_f32 = jax.block_until_ready(fwd_b_f32(x, first, core, last, bias))
    assert out_b_f32.shape == ref_b.shape, (out_b_f32.shape, ref_b.shape)
    assert jnp.allclose(out_b_f32, ref_b, atol=1e-4, rtol=1e-4), \
        float(jnp.max(jnp.abs(out_b_f32 - ref_b)))

    # --- config C: odd batch, Nb > 1 (block-wide im2col + batch padding) ---
    x5 = jax.random.normal(k_x2, (5, Cin, H, W), jnp.float32)
    ref_c = _reference(x5, first, core, last, bias, **cfg_a)
    fwd_c_f32 = jax.jit(functools.partial(conv_decomp_ae_forward, block_n=4,
                                          compute_dtype=jnp.float32, **cfg_a))
    out_c_f32 = jax.block_until_ready(fwd_c_f32(x5, first, core, last, bias))
    assert out_c_f32.shape == ref_c.shape, (out_c_f32.shape, ref_c.shape)
    assert jnp.allclose(out_c_f32, ref_c, atol=1e-4, rtol=1e-4), \
        float(jnp.max(jnp.abs(out_c_f32 - ref_c)))

    print("KERNEL_OK")
</pallas_src>

<mosaic_0001>
module attributes {stable_mosaic.version = 11 : i64} {
  func.func @_conv_decomp_kernel(%arg0: i32, %arg1: memref<1x8x326xf32, #tpu.memory_space<vmem>>, %arg2: memref<8x72xf32, #tpu.memory_space<vmem>>, %arg3: memref<6x8xf32, #tpu.memory_space<vmem>>, %arg4: memref<6x1xf32, #tpu.memory_space<vmem>>, %arg5: memref<1x6x288xf32, #tpu.memory_space<vmem>>, %arg6: memref<72x384xf32, #tpu.memory_space<vmem>>) attributes {dimension_semantics = [#tpu.dimension_semantics<parallel>], iteration_bounds = array<i64: 2>, scalar_prefetch = 0 : i64, scratch_operands = 1 : i64, tpu.core_type = #tpu.core_type<tc>, window_params = [{transform_indices = @transform_0, window_bounds = array<i64: 1, 8, 326>}, {pipeline_mode = #tpu.pipeline_mode<synchronous>, transform_indices = @transform_1, window_bounds = array<i64: 8, 72>}, {pipeline_mode = #tpu.pipeline_mode<synchronous>, transform_indices = @transform_2, window_bounds = array<i64: 6, 8>}, {pipeline_mode = #tpu.pipeline_mode<synchronous>, transform_indices = @transform_3, window_bounds = array<i64: 6, 1>}, {transform_indices = @transform_4, window_bounds = array<i64: 1, 6, 288>}]} {
    %c0 = arith.constant 0 : index
    %c0_0 = arith.constant 0 : index
    %c0_1 = arith.constant 0 : index
    %0 = vector.load %arg1[%c0, %c0_0, %c0_1] : memref<1x8x326xf32, #tpu.memory_space<vmem>>, vector<1x8x326xf32>
    %1 = vector.shape_cast %0 : vector<1x8x326xf32> to vector<8x326xf32>
    %2 = vector.extract_strided_slice %1 {offsets = [0, 0], sizes = [8, 288], strides = [1, 1]} : vector<8x326xf32> to vector<8x288xf32>
    %c0_2 = arith.constant 0 : index
    %c0_3 = arith.constant 0 : index
    %3 = vector.load %arg6[%c0_2, %c0_3] : memref<72x384xf32, #tpu.memory_space<vmem>>, vector<8x288xf32>
    tpu.vector_store %arg6[%c0_2, %c0_3], %2 {strides = array<i32>} : memref<72x384xf32, #tpu.memory_space<vmem>>, vector<8x288xf32>,
    %4 = vector.extract_strided_slice %1 {offsets = [0, 1], sizes = [8, 288], strides = [1, 1]} : vector<8x326xf32> to vector<8x288xf32>
    %c8 = arith.constant 8 : index
    %c0_4 = arith.constant 0 : index
    %5 = vector.load %arg6[%c8, %c0_4] : memref<72x384xf32, #tpu.memory_space<vmem>>, vector<8x288xf32>
    tpu.vector_store %arg6[%c8, %c0_4], %4 {strides = array<i32>} : memref<72x384xf32, #tpu.memory_space<vmem>>, vector<8x288xf32>,
    %6 = vector.extract_strided_slice %1 {offsets = [0, 2], sizes = [8, 288], strides = [1, 1]} : vector<8x326xf32> to vector<8x288xf32>
    %c16 = arith.constant 16 : index
    %c0_5 = arith.constant 0 : index
    %7 = vector.load %arg6[%c16, %c0_5] : memref<72x384xf32, #tpu.memory_space<vmem>>, vector<8x288xf32>
    tpu.vector_store %arg6[%c16, %c0_5], %6 {strides = array<i32>} : memref<72x384xf32, #tpu.memory_space<vmem>>, vector<8x288xf32>,
    %8 = vector.extract_strided_slice %1 {offsets = [0, 18], sizes = [8, 288], strides = [1, 1]} : vector<8x326xf32> to vector<8x288xf32>
    %c24 = arith.constant 24 : index
    %c0_6 = arith.constant 0 : index
    %9 = vector.load %arg6[%c24, %c0_6] : memref<72x384xf32, #tpu.memory_space<vmem>>, vector<8x288xf32>
    tpu.vector_store %arg6[%c24, %c0_6], %8 {strides = array<i32>} : memref<72x384xf32, #tpu.memory_space<vmem>>, vector<8x288xf32>,
    %10 = vector.extract_strided_slice %1 {offsets = [0, 19], sizes = [8, 288], strides = [1, 1]} : vector<8x326xf32> to vector<8x288xf32>
    %c32 = arith.constant 32 : index
    %c0_7 = arith.constant 0 : index
    %11 = vector.load %arg6[%c32, %c0_7] : memref<72x384xf32, #tpu.memory_space<vmem>>, vector<8x288xf32>
    tpu.vector_store %arg6[%c32, %c0_7], %10 {strides = array<i32>} : memref<72x384xf32, #tpu.memory_space<vmem>>, vector<8x288xf32>,
    %12 = vector.extract_strided_slice %1 {offsets = [0, 20], sizes = [8, 288], strides = [1, 1]} : vector<8x326xf32> to vector<8x288xf32>
    %c40 = arith.constant 40 : index
    %c0_8 = arith.constant 0 : index
    %13 = vector.load %arg6[%c40, %c0_8] : memref<72x384xf32, #tpu.memory_space<vmem>>, vector<8x288xf32>
    tpu.vector_store %arg6[%c40, %c0_8], %12 {strides = array<i32>} : memref<72x384xf32, #tpu.memory_space<vmem>>, vector<8x288xf32>,
    %14 = vector.extract_strided_slice %1 {offsets = [0, 36], sizes = [8, 288], strides = [1, 1]} : vector<8x326xf32> to vector<8x288xf32>
    %c48 = arith.constant 48 : index
    %c0_9 = arith.constant 0 : index
    %15 = vector.load %arg6[%c48, %c0_9] : memref<72x384xf32, #tpu.memory_space<vmem>>, vector<8x288xf32>
    tpu.vector_store %arg6[%c48, %c0_9], %14 {strides = array<i32>} : memref<72x384xf32, #tpu.memory_space<vmem>>, vector<8x288xf32>,
    %16 = vector.extract_strided_slice %1 {offsets = [0, 37], sizes = [8, 288], strides = [1, 1]} : vector<8x326xf32> to vector<8x288xf32>
    %c56 = arith.constant 56 : index
    %c0_10 = arith.constant 0 : index
    %17 = vector.load %arg6[%c56, %c0_10] : memref<72x384xf32, #tpu.memory_space<vmem>>, vector<8x288xf32>
    tpu.vector_store %arg6[%c56, %c0_10], %16 {strides = array<i32>} : memref<72x384xf32, #tpu.memory_space<vmem>>, vector<8x288xf32>,
    %18 = vector.extract_strided_slice %1 {offsets = [0, 38], sizes = [8, 288], strides = [1, 1]} : vector<8x326xf32> to vector<8x288xf32>
    %c64 = arith.constant 64 : index
    %c0_11 = arith.constant 0 : index
    %19 = vector.load %arg6[%c64, %c0_11] : memref<72x384xf32, #tpu.memory_space<vmem>>, vector<8x288xf32>
    tpu.vector_store %arg6[%c64, %c0_11], %18 {strides = array<i32>} : memref<72x384xf32, #tpu.memory_space<vmem>>, vector<8x288xf32>,
    %c0_12 = arith.constant 0 : index
    %c0_13 = arith.constant 0 : index
    %20 = vector.load %arg6[%c0_12, %c0_13] : memref<72x384xf32, #tpu.memory_space<vmem>>, vector<72x384xf32>
    %c0_14 = arith.constant 0 : index
    %c0_15 = arith.constant 0 : index
    %21 = vector.load %arg2[%c0_14, %c0_15] : memref<8x72xf32, #tpu.memory_space<vmem>>, vector<8x72xf32>
    %cst = arith.constant dense<0.000000e+00> : vector<8x384xf32>
    %22 = tpu.matmul %21, %20, %cst {dimension_numbers = #tpu.dot_dimension_numbers<[1], [0], [0], [1], [0, 0, 1, 1], [], []>} : vector<8x72xf32>, vector<72x384xf32>, vector<8x384xf32> -> vector<8x384xf32>
    %cst_16 = arith.constant 0.000000e+00 : f32
    %23 = vector.broadcast %cst_16 : f32 to vector<8x384xf32>
    %24 = arith.maximumf %22, %23 : vector<8x384xf32>
    %c0_17 = arith.constant 0 : index
    %c0_18 = arith.constant 0 : index
    %25 = vector.load %arg3[%c0_17, %c0_18] : memref<6x8xf32, #tpu.memory_space<vmem>>, vector<6x8xf32>
    %cst_19 = arith.constant dense<0.000000e+00> : vector<6x384xf32>
    %26 = tpu.matmul %25, %24, %cst_19 {dimension_numbers = #tpu.dot_dimension_numbers<[1], [0], [0], [1], [0, 0, 1, 1], [], []>} : vector<6x8xf32>, vector<8x384xf32>, vector<6x384xf32> -> vector<6x384xf32>
    %c0_20 = arith.constant 0 : index
    %c0_21 = arith.constant 0 : index
    %27 = vector.load %arg4[%c0_20, %c0_21] : memref<6x1xf32, #tpu.memory_space<vmem>>, vector<6x1xf32>
    %28 = vector.broadcast %27 : vector<6x1xf32> to vector<6x384xf32>
    %29 = arith.addf %26, %28 : vector<6x384xf32>
    %30 = vector.extract_strided_slice %29 {offsets = [0, 0], sizes = [6, 288], strides = [1, 1]} : vector<6x384xf32> to vector<6x288xf32>
    %c0_22 = arith.constant 0 : index
    %c0_23 = arith.constant 0 : index
    %c0_24 = arith.constant 0 : index
    %31 = vector.load %arg5[%c0_22, %c0_23, %c0_24] : memref<1x6x288xf32, #tpu.memory_space<vmem>>, vector<1x6x288xf32>
    %32 = vector.shape_cast %31 : vector<1x6x288xf32> to vector<6x288xf32>
    %33 = vector.shape_cast %30 : vector<6x288xf32> to vector<1x6x288xf32>
    tpu.vector_store %arg5[%c0_22, %c0_23, %c0_24], %33 {strides = array<i32>} : memref<1x6x288xf32, #tpu.memory_space<vmem>>, vector<1x6x288xf32>,
    return
  }
  func.func @transform_0(%arg0: i32) -> (i32, i32, i32) {
    %c0_i32 = arith.constant 0 : i32
    %c0_i32_0 = arith.constant 0 : i32
    %c0_i32_1 = arith.constant 0 : i32
    return %arg0, %c0_i32, %c0_i32_0 : i32, i32, i32
  }
  func.func @transform_1(%arg0: i32) -> (i32, i32) {
    %c0_i32 = arith.constant 0 : i32
    %c0_i32_0 = arith.constant 0 : i32
    %c0_i32_1 = arith.constant 0 : i32
    return %c0_i32, %c0_i32_0 : i32, i32
  }
  func.func @transform_2(%arg0: i32) -> (i32, i32) {
    %c0_i32 = arith.constant 0 : i32
    %c0_i32_0 = arith.constant 0 : i32
    %c0_i32_1 = arith.constant 0 : i32
    return %c0_i32, %c0_i32_0 : i32, i32
  }
  func.func @transform_3(%arg0: i32) -> (i32, i32) {
    %c0_i32 = arith.constant 0 : i32
    %c0_i32_0 = arith.constant 0 : i32
    %c0_i32_1 = arith.constant 0 : i32
    return %c0_i32, %c0_i32_0 : i32, i32
  }
  func.func @transform_4(%arg0: i32) -> (i32, i32, i32) {
    %c0_i32 = arith.constant 0 : i32
    %c0_i32_0 = arith.constant 0 : i32
    %c0_i32_1 = arith.constant 0 : i32
    return %arg0, %c0_i32, %c0_i32_0 : i32, i32, i32
  }
}

</mosaic_0001>

<llo_original>
// kernel: conv_decomp_ae_forward.1
$region0: #{conv_decomp_ae_forward.1}
  #allocation0 [shape = 'u32[]', space=smem, size = 0x4, offset = 0x4, fixed_abs, tag = 'smem constant byte address 0x4 - core index']
  #allocation1 [shape = 'u32[72,128]{1,0:T(1,128)}', space=vmem, size = 0x9000, scoped, tag = 'internal scratch']
  #allocation2 [shape = 'f32[72,384]{1,0:T(8,128)}', space=vmem, size = 0x1b000, scoped, tag = 'scratch operand']
  %s0 = inlined_call_operand.vmem [shape: f32[2,8,326], index: 0, kind: input, shape index: {}]
  %s1 = inlined_call_operand.vmem [shape: f32[8,72], index: 1, kind: input, shape index: {}]
  %s2 = inlined_call_operand.vmem [shape: f32[6,8], index: 2, kind: input, shape index: {}]
  %s3 = inlined_call_operand.vmem [shape: f32[6,1], index: 3, kind: input, shape index: {}]
  %s4 = inlined_call_operand.vmem [shape: f32[2,6,288], index: 4, kind: output, shape index: {}]
  %s5 = sld [smem:[#allocation0]]
  $region49: #{conv_decomp_ae_forward.1} parent=0
    _
  %s7 = ssub.s32 1, %s5
  %s8 = scalar_select 0, %s7, %s5
  loop: start=0, step=1, limit=4
  $region2: #{conv_decomp_ae_forward.1} parent=0 // loop_pre_header
    _
  $region3: #{conv_decomp_ae_forward.1} parent=0 // loop_header
    %s10 = sphi 0, %s14
    %p11 = scmp.ge.s32.totalorder %s10, 4
    %s20 = sphi 0, %s22
    %s23 = sphi 0, %s20
    %s24 = sphi 0, %s23
    %s40 = sphi 0, %s24
    %s44 = sphi 0, %s44
    %s46 = sphi 0, %s44
    %s47 = sphi 0, %s46
    %s61 = sphi 0, %s47
    %s65 = sphi 0, %s65
    %s67 = sphi 0, %s65
    %s68 = sphi 0, %s67
    %s82 = sphi 0, %s68
    %s86 = sphi 0, %s86
    %s88 = sphi 0, %s86
    %s89 = sphi 0, %s88
    %s103 = sphi 0, %s89
    %s109 = sphi 0, %s111
    %s112 = sphi 0, %s109
    %s113 = sphi 0, %s112
    %s129 = sphi 0, %s113
  $region4: #{conv_decomp_ae_forward.1} parent=0 // loop_header_branch
    %13 = sbr.rel (%p11) target = $region8
  $region5: #{conv_decomp_ae_forward.1} parent=0 // loop_body
    %s15 = ssub.s32 %s10, 1
    %s16 = ssub.s32 %s10, 2
    %s17 = sadd.s32 %s10, 1
    %s18 = ssub.s32 %s10, %s17
    %p19 = scmp.eq.s32.totalorder %s18, 0
    %s21 = sadd.s32 %s20, 1
    %s22 = scalar_select %p19, %s20, %s21
    %p25 = pneg %p19
    %p26 = scmp.eq.s32.totalorder %s10, 1
    %p27 = por %p25, %p26
    %p28 = scmp.ne.s32.totalorder %s20, %s23
    %p29 = scmp.eq.s32.totalorder %s10, 0
    %p30 = por %p28, %p29
    %p31 = scmp.ne.s32.totalorder %s20, %s23
    %p32 = scmp.eq.s32.totalorder %s15, 1
    %p33 = por %p31, %p32
    %p34 = scmp.ne.s32.totalorder %s23, %s24
    %p35 = scmp.eq.s32.totalorder %s15, 0
    %p36 = por %p34, %p35
    %p37 = scmp.ne.s32.totalorder %s23, %s24
    %p38 = scmp.eq.s32.totalorder %s16, 1
    %p39 = por %p37, %p38
    %p41 = scmp.ne.s32.totalorder %s24, %s40
    %p42 = scmp.eq.s32.totalorder %s16, 0
    %p43 = por %p41, %p42
    %s45 = sadd.s32 %s44, 1
    %p48 = scmp.eq.s32.totalorder %s10, 1
    %p49 = scmp.ne.s32.totalorder %s44, %s46
    %p50 = scmp.eq.s32.totalorder %s10, 0
    %p51 = por %p49, %p50
    %p52 = scmp.ne.s32.totalorder %s44, %s46
    %p53 = scmp.eq.s32.totalorder %s15, 1
    %p54 = por %p52, %p53
    %p55 = scmp.ne.s32.totalorder %s46, %s47
    %p56 = scmp.eq.s32.totalorder %s15, 0
    %p57 = por %p55, %p56
    %p58 = scmp.ne.s32.totalorder %s46, %s47
    %p59 = scmp.eq.s32.totalorder %s16, 1
    %p60 = por %p58, %p59
    %p62 = scmp.ne.s32.totalorder %s47, %s61
    %p63 = scmp.eq.s32.totalorder %s16, 0
    %p64 = por %p62, %p63
    %s66 = sadd.s32 %s65, 1
    %p69 = scmp.eq.s32.totalorder %s10, 1
    %p70 = scmp.ne.s32.totalorder %s65, %s67
    %p71 = scmp.eq.s32.totalorder %s10, 0
    %p72 = por %p70, %p71
    %p73 = scmp.ne.s32.totalorder %s65, %s67
    %p74 = scmp.eq.s32.totalorder %s15, 1
    %p75 = por %p73, %p74
    %p76 = scmp.ne.s32.totalorder %s67, %s68
    %p77 = scmp.eq.s32.totalorder %s15, 0
    %p78 = por %p76, %p77
    %p79 = scmp.ne.s32.totalorder %s67, %s68
    %p80 = scmp.eq.s32.totalorder %s16, 1
    %p81 = por %p79, %p80
    %p83 = scmp.ne.s32.totalorder %s68, %s82
    %p84 = scmp.eq.s32.totalorder %s16, 0
    %p85 = por %p83, %p84
    %s87 = sadd.s32 %s86, 1
    %p90 = scmp.eq.s32.totalorder %s10, 1
    %p91 = scmp.ne.s32.totalorder %s86, %s88
    %p92 = scmp.eq.s32.totalorder %s10, 0
    %p93 = por %p91, %p92
    %p94 = scmp.ne.s32.totalorder %s86, %s88
    %p95 = scmp.eq.s32.totalorder %s15, 1
    %p96 = por %p94, %p95
    %p97 = scmp.ne.s32.totalorder %s88, %s89
    %p98 = scmp.eq.s32.totalorder %s15, 0
    %p99 = por %p97, %p98
    %p100 = scmp.ne.s32.totalorder %s88, %s89
    %p101 = scmp.eq.s32.totalorder %s16, 1
    %p102 = por %p100, %p101
    %p104 = scmp.ne.s32.totalorder %s89, %s103
    %p105 = scmp.eq.s32.totalorder %s16, 0
    %p106 = por %p104, %p105
    %s107 = ssub.s32 %s10, %s17
    %p108 = scmp.eq.s32.totalorder %s107, 0
    %s110 = sadd.s32 %s109, 1
    %s111 = scalar_select %p108, %s109, %s110
    %p114 = pneg %p108
    %p115 = scmp.eq.s32.totalorder %s10, 1
    %p116 = por %p114, %p115
    %p117 = scmp.ne.s32.totalorder %s109, %s112
    %p118 = scmp.eq.s32.totalorder %s10, 0
    %p119 = por %p117, %p118
    %p120 = scmp.ne.s32.totalorder %s109, %s112
    %p121 = scmp.eq.s32.totalorder %s15, 1
    %p122 = por %p120, %p121
    %p123 = scmp.ne.s32.totalorder %s112, %s113
    %p124 = scmp.eq.s32.totalorder %s15, 0
    %p125 = por %p123, %p124
    %p126 = scmp.ne.s32.totalorder %s112, %s113
    %p127 = scmp.eq.s32.totalorder %s16, 1
    %p128 = por %p126, %p127
    %p130 = scmp.ne.s32.totalorder %s113, %s129
    %p131 = scmp.eq.s32.totalorder %s16, 0
    %p132 = por %p130, %p131
    %p133 = scmp.le.s32.totalorder 1, %s10
    %p134 = scmp.lt.s32.totalorder %s10, 3
    %p135 = pnand %p133, %p134
    %p136 = pneg %p135
    // Predicated region
    $region9: #{conv_decomp_ae_forward.1} parent=5 // pred_check
      _
    $region10: #{conv_decomp_ae_forward.1} parent=5 // pred_check_branch
      %138 = sbr.rel (%p135) target = $region12
    $region11: #{conv_decomp_ae_forward.1} parent=5 // pred_region
      %s139 = ssub.s32 %s10, 1
      // Predicated region
      $region13: #{conv_decomp_ae_forward.1} parent=11 // pred_check
        %p140 = pneg %p57
      $region14: #{conv_decomp_ae_forward.1} parent=11 // pred_check_branch
        %142 = sbr.rel (%p140) target = $region16
      $region15: #{conv_decomp_ae_forward.1} parent=11 // pred_region
        _
      $region16: #{conv_decomp_ae_forward.1} parent=11 // pred_fallthru
        _
      // Predicated region
      $region17: #{conv_decomp_ae_forward.1} parent=11 // pred_check
        %p143 = pneg %p78
      $region18: #{conv_decomp_ae_forward.1} parent=11 // pred_check_branch
        %145 = sbr.rel (%p143) target = $region20
      $region19: #{conv_decomp_ae_forward.1} parent=11 // pred_region
        _
      $region20: #{conv_decomp_ae_forward.1} parent=11 // pred_fallthru
        _
      // Predicated region
      $region21: #{conv_decomp_ae_forward.1} parent=11 // pred_check
        %p146 = pneg %p99
      $region22: #{conv_decomp_ae_forward.1} parent=11 // pred_check_branch
        %148 = sbr.rel (%p146) target = $region24
      $region23: #{conv_decomp_ae_forward.1} parent=11 // pred_region
        _
      $region24: #{conv_decomp_ae_forward.1} parent=11 // pred_fallthru
        _
    $region12: #{conv_decomp_ae_forward.1} parent=5 // pred_fallthru
      _
    %p149 = scmp.lt.s32.totalorder %s10, 2
    // Predicated region
    $region25: #{conv_decomp_ae_forward.1} parent=5 // pred_check
      %p150 = pneg %p149
    $region26: #{conv_decomp_ae_forward.1} parent=5 // pred_check_branch
      %152 = sbr.rel (%p150) target = $region28
    $region27: #{conv_decomp_ae_forward.1} parent=5 // pred_region
      // Predicated region
      $region29: #{conv_decomp_ae_forward.1} parent=27 // pred_check
        %p153 = pneg %p30
      $region30: #{conv_decomp_ae_forward.1} parent=27 // pred_check_branch
        %155 = sbr.rel (%p153) target = $region32
      $region31: #{conv_decomp_ae_forward.1} parent=27 // pred_region
        %p156 = scmp.lt.s32.totalorder %s10, 1
        %s157 = scalar_select %p156, %s10, 1
        %s158 = smul.addr %s157, 3
        %s159 = smul.addr %s158, 8
        %s160 = scalar_lea.vmem %s0, %s159
      $region32: #{conv_decomp_ae_forward.1} parent=27 // pred_fallthru
        _
    $region28: #{conv_decomp_ae_forward.1} parent=5 // pred_fallthru
      _
    %p161 = scmp.le.s32.totalorder 1, %s10
    %p162 = scmp.lt.s32.totalorder %s10, 3
    %p163 = pnand %p161, %p162
    %p164 = pneg %p163
    // Predicated region
    $region33: #{conv_decomp_ae_forward.1} parent=5 // pred_check
      _
    $region34: #{conv_decomp_ae_forward.1} parent=5 // pred_check_branch
      %166 = sbr.rel (%p163) target = $region36
    $region35: #{conv_decomp_ae_forward.1} parent=5 // pred_region
      %s167 = ssub.s32 %s10, 1
      %p168 = scmp.lt.s32.totalorder %s15, 1
      %s169 = scalar_select %p168, %s15, 1
      %s170 = smul.addr %s169, 3
      %s171 = smul.addr %s170, 8
      %s172 = scalar_lea.vmem %s0, %s171
      %p173 = pneg %p36
      %p174 = pneg %p33
      %p175 = pneg %p57
      %p176 = pneg %p54
      %p177 = pneg %p78
      %p178 = pneg %p75
      %p179 = pneg %p99
      %p180 = pneg %p96
      %p181 = pneg %p125
      %p182 = pneg %p122
      %p183 = scmp.lt.s32.totalorder %s15, 1
      %s184 = scalar_select %p183, %s15, 1
      %s185 = smul.addr %s184, 3
      %s186 = smul.addr %s185, 8
      %s187 = scalar_lea.vmem %s4, %s186
      %p188 = scmp.lt.s32.totalorder %s15, 1
      %s189 = scalar_select %p188, %s15, 1
      %s190 = smul.addr %s189, 3
      %s191 = smul.addr %s190, 8
      %s192 = scalar_lea.vmem %s0, %s191
      %p193 = scmp.lt.s32.totalorder %s15, 1
      %s194 = scalar_select %p193, %s15, 1
      %s195 = smul.addr %s194, 3
      %s196 = smul.addr %s195, 8
      %s197 = scalar_lea.vmem %s4, %s196
      %v198 = vld [vmem:[%s192] sm:$0xff]
      %v199 = vld [vmem:[%s192 + $0x8] sm:$0xff]
      %v200 = vld [vmem:[%s192 + $0x10] sm:$0xff]
      %201 = vst [vmem:[#allocation2] sm:$0xff] %v198
      %202 = vst [vmem:[#allocation2 + $0x8] sm:$0xff] %v199
      %vm203 = vcmask 261120
      %204 = vst.msk [vmem:[#allocation2 + $0x10] sm:$0xff] %vm203, %v200
      %208 = vrot.lane.b32.xlu0 %v198, 127
      %v209 = vpop.permute.xlu0 %208
      %210 = vrot.lane.b32.xlu0 %v199, 127
      %v211 = vpop.permute.xlu0 %210
      %212 = vrot.lane.b32.xlu0 %v200, 127
      %v213 = vpop.permute.xlu0 %212
      %vm214 = vcmask 1039360
      %v215 = vsel %vm214, %v209, %v211
      %v216 = vsel %vm214, %v211, %v213
      %220 = vst [vmem:[#allocation2 + $0x18] sm:$0xff] %v215
      %221 = vst [vmem:[#allocation2 + $0x20] sm:$0xff] %v216
      %222 = vst.msk [vmem:[#allocation2 + $0x28] sm:$0xff] %vm203, %v213
      %223 = vrot.lane.b32.xlu0 %v198, 126
      %v224 = vpop.permute.xlu0 %223
      %225 = vrot.lane.b32.xlu0 %v199, 126
      %v226 = vpop.permute.xlu0 %225
      %227 = vrot.lane.b32.xlu0 %v200, 126
      %v228 = vpop.permute.xlu0 %227
      %vm229 = vcmask 1031168
      %v230 = vsel %vm229, %v224, %v226
      %v231 = vsel %vm229, %v226, %v228
      %235 = vst [vmem:[#allocation2 + $0x30] sm:$0xff] %v230
      %236 = vst [vmem:[#allocation2 + $0x38] sm:$0xff] %v231
      %237 = vst.msk [vmem:[#allocation2 + $0x40] sm:$0xff] %vm203, %v228
      %238 = vrot.lane.b32.xlu0 %v198, 110
      %v239 = vpop.permute.xlu0 %238
      %240 = vrot.lane.b32.xlu0 %v199, 110
      %v241 = vpop.permute.xlu0 %240
      %242 = vrot.lane.b32.xlu0 %v200, 110
      %v243 = vpop.permute.xlu0 %242
      %vm244 = vcmask 900096
      %v245 = vsel %vm244, %v239, %v241
      %v246 = vsel %vm244, %v241, %v243
      %250 = vst [vmem:[#allocation2 + $0x48] sm:$0xff] %v245
      %251 = vst [vmem:[#allocation2 + $0x50] sm:$0xff] %v246
      %252 = vst.msk [vmem:[#allocation2 + $0x58] sm:$0xff] %vm203, %v243
      %253 = vrot.lane.b32.xlu0 %v198, 109
      %v254 = vpop.permute.xlu0 %253
      %255 = vrot.lane.b32.xlu0 %v199, 109
      %v256 = vpop.permute.xlu0 %255
      %257 = vrot.lane.b32.xlu0 %v200, 109
      %v258 = vpop.permute.xlu0 %257
      %vm259 = vcmask 891904
      %v260 = vsel %vm259, %v254, %v256
      %v261 = vsel %vm259, %v256, %v258
      %265 = vst [vmem:[#allocation2 + $0x60] sm:$0xff] %v260
      %266 = vst [vmem:[#allocation2 + $0x68] sm:$0xff] %v261
      %267 = vst.msk [vmem:[#allocation2 + $0x70] sm:$0xff] %vm203, %v258
      %268 = vrot.lane.b32.xlu0 %v198, 108
      %v269 = vpop.permute.xlu0 %268
      %270 = vrot.lane.b32.xlu0 %v199, 108
      %v271 = vpop.permute.xlu0 %270
      %272 = vrot.lane.b32.xlu0 %v200, 108
      %v273 = vpop.permute.xlu0 %272
      %vm274 = vcmask 883712
      %v275 = vsel %vm274, %v269, %v271
      %v276 = vsel %vm274, %v271, %v273
      %280 = vst [vmem:[#allocation2 + $0x78] sm:$0xff] %v275
      %281 = vst [vmem:[#allocation2 + $0x80] sm:$0xff] %v276
      %282 = vst.msk [vmem:[#allocation2 + $0x88] sm:$0xff] %vm203, %v273
      %283 = vrot.lane.b32.xlu0 %v198, 92
      %v284 = vpop.permute.xlu0 %283
      %285 = vrot.lane.b32.xlu0 %v199, 92
      %v286 = vpop.permute.xlu0 %285
      %287 = vrot.lane.b32.xlu0 %v200, 92
      %v288 = vpop.permute.xlu0 %287
      %vm289 = vcmask 752640
      %v290 = vsel %vm289, %v284, %v286
      %v291 = vsel %vm289, %v286, %v288
      %295 = vst [vmem:[#allocation2 + $0x90] sm:$0xff] %v290
      %296 = vst [vmem:[#allocation2 + $0x98] sm:$0xff] %v291
      %297 = vst.msk [vmem:[#allocation2 + $0xa0] sm:$0xff] %vm203, %v288
      %298 = vrot.lane.b32.xlu0 %v198, 91
      %v299 = vpop.permute.xlu0 %298
      %300 = vrot.lane.b32.xlu0 %v199, 91
      %v301 = vpop.permute.xlu0 %300
      %302 = vrot.lane.b32.xlu0 %v200, 91
      %v303 = vpop.permute.xlu0 %302
      %vm304 = vcmask 744448
      %v305 = vsel %vm304, %v299, %v301
      %v306 = vsel %vm304, %v301, %v303
      %310 = vst [vmem:[#allocation2 + $0xa8] sm:$0xff] %v305
      %311 = vst [vmem:[#allocation2 + $0xb0] sm:$0xff] %v306
      %312 = vst.msk [vmem:[#allocation2 + $0xb8] sm:$0xff] %vm203, %v303
      %313 = vrot.lane.b32.xlu0 %v198, 90
      %v314 = vpop.permute.xlu0 %313
      %315 = vrot.lane.b32.xlu0 %v199, 90
      %v316 = vpop.permute.xlu0 %315
      %317 = vrot.lane.b32.xlu0 %v200, 90
      %v318 = vpop.permute.xlu0 %317
      %vm319 = vcmask 736256
      %v320 = vsel %vm319, %v314, %v316
      %v321 = vsel %vm319, %v316, %v318
      %325 = vst [vmem:[#allocation2 + $0xc0] sm:$0xff] %v320
      %326 = vst [vmem:[#allocation2 + $0xc8] sm:$0xff] %v321
      %327 = vst.msk [vmem:[#allocation2 + $0xd0] sm:$0xff] %vm203, %v318
      %v328 = vld [vmem:[#allocation2] sm:$0xff]
      %v329 = vld [vmem:[#allocation2 + $0x8] sm:$0xff]
      %v330 = vld [vmem:[#allocation2 + $0x10] sm:$0xff]
      %v331 = vld [vmem:[#allocation2 + $0x18] sm:$0xff]
      %v332 = vld [vmem:[#allocation2 + $0x20] sm:$0xff]
      %v333 = vld [vmem:[#allocation2 + $0x28] sm:$0xff]
      %v334 = vld [vmem:[#allocation2 + $0x30] sm:$0xff]
      %v335 = vld [vmem:[#allocation2 + $0x38] sm:$0xff]
      %v336 = vld [vmem:[#allocation2 + $0x40] sm:$0xff]
      %v337 = vld [vmem:[#allocation2 + $0x48] sm:$0xff]
      %v338 = vld [vmem:[#allocation2 + $0x50] sm:$0xff]
      %v339 = vld [vmem:[#allocation2 + $0x58] sm:$0xff]
      %v340 = vld [vmem:[#allocation2 + $0x60] sm:$0xff]
      %v341 = vld [vmem:[#allocation2 + $0x68] sm:$0xff]
      %v342 = vld [vmem:[#allocation2 + $0x70] sm:$0xff]
      %v343 = vld [vmem:[#allocation2 + $0x78] sm:$0xff]
      %v344 = vld [vmem:[#allocation2 + $0x80] sm:$0xff]
      %v345 = vld [vmem:[#allocation2 + $0x88] sm:$0xff]
      %v346 = vld [vmem:[#allocation2 + $0x90] sm:$0xff]
      %v347 = vld [vmem:[#allocation2 + $0x98] sm:$0xff]
      %v348 = vld [vmem:[#allocation2 + $0xa0] sm:$0xff]
      %v349 = vld [vmem:[#allocation2 + $0xa8] sm:$0xff]
      %v350 = vld [vmem:[#allocation2 + $0xb0] sm:$0xff]
      %v351 = vld [vmem:[#allocation2 + $0xb8] sm:$0xff]
      %v352 = vld [vmem:[#allocation2 + $0xc0] sm:$0xff]
      %v353 = vld [vmem:[#allocation2 + $0xc8] sm:$0xff]
      %v354 = vld [vmem:[#allocation2 + $0xd0] sm:$0xff]
      %v355 = vld [vmem:[%s1] sm:$0xff]
      %vm356 = vcmask 588800
      %v358 = vsel %vm356, %v355, 0
      %360 = vmatpush.msra.mxu0 0.0
      %361 = vmatpush.msra.mxu0 0.0
      %362 = vmatpush.msra.mxu0 0.0
      %363 = vmatpush.msra.mxu0 0.0
      %364 = vmatpush.msra.mxu0 0.0
      %365 = vmatpush.msra.mxu0 0.0
      %366 = vmatpush.msra.mxu0 0.0
      %367 = vmatpush.msra.mxu0 %v352
      %368 = vmatpush.msra.mxu0 %v349
      %369 = vmatpush.msra.mxu0 %v346
      %370 = vmatpush.msra.mxu0 %v343
      %371 = vmatpush.msra.mxu0 %v340
      %372 = vmatpush.msra.mxu0 %v337
      %373 = vmatpush.msra.mxu0 %v334
      %374 = vmatpush.msra.mxu0 %v331
      %375 = vmatpush.msra.mxu0 %v328
      %376 = vmatmul.f32.gmra.mxu0 %v358
      %v377 = vpop.f32.mrf.mxu0
      %v378 = vadd.f32 0.0, %v377
      %379 = vdwg.mxu0
      %380 = vmatpush.msra.mxu0 0.0
      %381 = vmatpush.msra.mxu0 0.0
      %382 = vmatpush.msra.mxu0 0.0
      %383 = vmatpush.msra.mxu0 0.0
      %384 = vmatpush.msra.mxu0 0.0
      %385 = vmatpush.msra.mxu0 0.0
      %386 = vmatpush.msra.mxu0 0.0
      %387 = vmatpush.msra.mxu0 %v353
      %388 = vmatpush.msra.mxu0 %v350
      %389 = vmatpush.msra.mxu0 %v347
      %390 = vmatpush.msra.mxu0 %v344
      %391 = vmatpush.msra.mxu0 %v341
      %392 = vmatpush.msra.mxu0 %v338
      %393 = vmatpush.msra.mxu0 %v335
      %394 = vmatpush.msra.mxu0 %v332
      %395 = vmatpush.msra.mxu0 %v329
      %396 = vmatmul.f32.gmra.mxu0 %v358
      %v397 = vpop.f32.mrf.mxu0
      %v398 = vadd.f32 0.0, %v397
      %399 = vdwg.mxu0
      %400 = vmatpush.msra.mxu0 0.0
      %401 = vmatpush.msra.mxu0 0.0
      %402 = vmatpush.msra.mxu0 0.0
      %403 = vmatpush.msra.mxu0 0.0
      %404 = vmatpush.msra.mxu0 0.0
      %405 = vmatpush.msra.mxu0 0.0
      %406 = vmatpush.msra.mxu0 0.0
      %407 = vmatpush.msra.mxu0 %v354
      %408 = vmatpush.msra.mxu0 %v351
      %409 = vmatpush.msra.mxu0 %v348
      %410 = vmatpush.msra.mxu0 %v345
      %411 = vmatpush.msra.mxu0 %v342
      %412 = vmatpush.msra.mxu0 %v339
      %413 = vmatpush.msra.mxu0 %v336
      %414 = vmatpush.msra.mxu0 %v333
      %415 = vmatpush.msra.mxu0 %v330
      %416 = vmatmul.f32.gmra.mxu0 %v358
      %v417 = vpop.f32.mrf.mxu0
      %v418 = vadd.f32 0.0, %v417
      %419 = vdwg.mxu0
      %v420 = vmax.f32 %v378, 0.0
      %v421 = vmax.f32 %v398, 0.0
      %v422 = vmax.f32 %v418, 0.0
      %v423 = vld [vmem:[%s2] sm:$0x3f]
      %v424 = vld [vmem:[%s3] sm:$0x3f]
      %426 = vset.pattern.permute.xlu0 0
      %427 = vperm.xlu0 %426, %v424
      %v428 = vpop.permute.xlu0 %427
      %vm430 = vcmask 64512
      %v432 = vsel %vm430, %v423, 0
      %434 = vmatpush.msra.mxu0 0.0
      %435 = vmatpush.msra.mxu0 0.0
      %436 = vmatpush.msra.mxu0 0.0
      %437 = vmatpush.msra.mxu0 0.0
      %438 = vmatpush.msra.mxu0 0.0
      %439 = vmatpush.msra.mxu0 0.0
      %440 = vmatpush.msra.mxu0 0.0
      %441 = vmatpush.msra.mxu0 0.0
      %442 = vmatpush.msra.mxu0 0.0
      %443 = vmatpush.msra.mxu0 0.0
      %444 = vmatpush.msra.mxu0 0.0
      %445 = vmatpush.msra.mxu0 0.0
      %446 = vmatpush.msra.mxu0 0.0
      %447 = vmatpush.msra.mxu0 0.0
      %448 = vmatpush.msra.mxu0 0.0
      %449 = vmatpush.msra.mxu0 %v420
      %450 = vmatmul.f32.gmra.mxu0 %v432
      %v451 = vpop.f32.mrf.mxu0
      %v452 = vadd.f32 %v428, %v451
      %453 = vdwg.mxu0
      %454 = vmatpush.msra.mxu0 0.0
      %455 = vmatpush.msra.mxu0 0.0
      %456 = vmatpush.msra.mxu0 0.0
      %457 = vmatpush.msra.mxu0 0.0
      %458 = vmatpush.msra.mxu0 0.0
      %459 = vmatpush.msra.mxu0 0.0
      %460 = vmatpush.msra.mxu0 0.0
      %461 = vmatpush.msra.mxu0 0.0
      %462 = vmatpush.msra.mxu0 0.0
      %463 = vmatpush.msra.mxu0 0.0
      %464 = vmatpush.msra.mxu0 0.0
      %465 = vmatpush.msra.mxu0 0.0
      %466 = vmatpush.msra.mxu0 0.0
      %467 = vmatpush.msra.mxu0 0.0
      %468 = vmatpush.msra.mxu0 0.0
      %469 = vmatpush.msra.mxu0 %v421
      %470 = vmatmul.f32.gmra.mxu0 %v432
      %v471 = vpop.f32.mrf.mxu0
      %v472 = vadd.f32 %v428, %v471
      %473 = vdwg.mxu0
      %474 = vmatpush.msra.mxu0 0.0
      %475 = vmatpush.msra.mxu0 0.0
      %476 = vmatpush.msra.mxu0 0.0
      %477 = vmatpush.msra.mxu0 0.0
      %478 = vmatpush.msra.mxu0 0.0
      %479 = vmatpush.msra.mxu0 0.0
      %480 = vmatpush.msra.mxu0 0.0
      %481 = vmatpush.msra.mxu0 0.0
      %482 = vmatpush.msra.mxu0 0.0
      %483 = vmatpush.msra.mxu0 0.0
      %484 = vmatpush.msra.mxu0 0.0
      %485 = vmatpush.msra.mxu0 0.0
      %486 = vmatpush.msra.mxu0 0.0
      %487 = vmatpush.msra.mxu0 0.0
      %488 = vmatpush.msra.mxu0 0.0
      %489 = vmatpush.msra.mxu0 %v422
      %490 = vmatmul.f32.gmra.mxu0 %v432
      %v491 = vpop.f32.mrf.mxu0
      %v492 = vadd.f32 %v428, %v491
      %493 = vdwg.mxu0
      %494 = vst [vmem:[%s197] sm:$0x3f] %v452
      %495 = vst [vmem:[%s197 + $0x8] sm:$0x3f] %v472
      %vm496 = vcmask 259072
      %497 = vst.msk [vmem:[%s197 + $0x10] sm:$0x3f] %vm496, %v492
      %p498 = scmp.lt.s32.totalorder %s15, 1
      %s499 = scalar_select %p498, %s15, 1
      %s500 = smul.addr %s499, 3
      %s501 = smul.addr %s500, 8
      %s502 = scalar_lea.vmem %s4, %s501
      // Predicated region
      $region37: #{conv_decomp_ae_forward.1} parent=35 // pred_check
        %p503 = pneg %p122
      $region38: #{conv_decomp_ae_forward.1} parent=35 // pred_check_branch
        %505 = sbr.rel (%p503) target = $region40
      $region39: #{conv_decomp_ae_forward.1} parent=35 // pred_region
        _
      $region40: #{conv_decomp_ae_forward.1} parent=35 // pred_fallthru
        _
    $region36: #{conv_decomp_ae_forward.1} parent=5 // pred_fallthru
      _
    %p506 = scmp.le.s32.totalorder 2, %s10
    // Predicated region
    $region41: #{conv_decomp_ae_forward.1} parent=5 // pred_check
      %p507 = pneg %p506
    $region42: #{conv_decomp_ae_forward.1} parent=5 // pred_check_branch
      %509 = sbr.rel (%p507) target = $region44
    $region43: #{conv_decomp_ae_forward.1} parent=5 // pred_region
      %s510 = ssub.s32 %s10, 2
      // Predicated region
      $region45: #{conv_decomp_ae_forward.1} parent=43 // pred_check
        %p511 = pneg %p128
      $region46: #{conv_decomp_ae_forward.1} parent=43 // pred_check_branch
        %513 = sbr.rel (%p511) target = $region48
      $region47: #{conv_decomp_ae_forward.1} parent=43 // pred_region
        %p514 = scmp.lt.s32.totalorder %s16, 1
        %s515 = scalar_select %p514, %s16, 1
        %s516 = smul.addr %s515, 3
        %s517 = smul.addr %s516, 8
        %s518 = scalar_lea.vmem %s4, %s517
      $region48: #{conv_decomp_ae_forward.1} parent=43 // pred_fallthru
        _
    $region44: #{conv_decomp_ae_forward.1} parent=5 // pred_fallthru
      _
  $region6: #{conv_decomp_ae_forward.1} parent=0 // loop_footer
    %s14 = sadd.s32 1, %s10
  $region7: #{conv_decomp_ae_forward.1} parent=0 // loop_footer_branch
    %9 = sbr.rel target = $region3
  $region8: #{conv_decomp_ae_forward.1} parent=0 // loop_exit
    _

</llo_original>
